<compile_context>
chip_gen: v5e
topology: v5e:2x2
jax: 0.10.0
libtpu: 0.0.40
codegen_flags: <defaults>
</compile_context>

<pallas_src>
import jax
import jax.numpy as jnp
from jax.experimental import pallas as pl
from jax.experimental.pallas import tpu as pltpu

LANE = 128  # lane-dense padded width for all feature dims


def _round_up(x, m):
    return (x + m - 1) // m * m


def gcn_forward_kernel(a_ref, x_ref,
                       w1_ref, b1_ref,
                       w2_ref, b2_ref,
                       w3_ref, b3_ref,
                       wc_ref, bc_ref,
                       out_ref, h_ref):
    """3x (feature matmul -> adjacency matmul -> bias -> tanh) + linear classifier.

    All matmul operands are bf16 (MXU-friendly); accumulation, bias and tanh are f32.
    Every tensor is lane-dense ([*, 128]) so loads/stores are unmasked.
    """
    a = a_ref[...]                                            # [Np, Np] bf16

    # --- GCNConv1: tanh(A_hat @ (X W1) + b1) ---
    z = jnp.dot(x_ref[...], w1_ref[...], preferred_element_type=jnp.float32)
    h = jnp.dot(a, z.astype(jnp.bfloat16), preferred_element_type=jnp.float32)
    h = jnp.tanh(h + b1_ref[...])

    # --- GCNConv2 ---
    z = jnp.dot(h.astype(jnp.bfloat16), w2_ref[...], preferred_element_type=jnp.float32)
    h = jnp.dot(a, z.astype(jnp.bfloat16), preferred_element_type=jnp.float32)
    h = jnp.tanh(h + b2_ref[...])

    # --- GCNConv3 (embedding, returned as `h`) ---
    z = jnp.dot(h.astype(jnp.bfloat16), w3_ref[...], preferred_element_type=jnp.float32)
    h = jnp.dot(a, z.astype(jnp.bfloat16), preferred_element_type=jnp.float32)
    h = jnp.tanh(h + b3_ref[...])
    h_ref[...] = h                                            # [Np, 128] f32, lane-dense

    # --- classifier: Linear(2 -> num_classes), padded to 128 lanes ---
    out_ref[...] = jnp.dot(h.astype(jnp.bfloat16), wc_ref[...],
                           preferred_element_type=jnp.float32) + bc_ref[...]


def _pad2(m, rows, cols, dtype):
    """Zero-pad a 2-D array to (rows, cols) and cast."""
    out = jnp.zeros((rows, cols), dtype)
    return out.at[:m.shape[0], :m.shape[1]].set(m.astype(dtype))


def gcn_forward(a_hat, x, params):
    """params = (w1, b1, w2, b2, w3, b3, wc, bc); biases shaped [1, C]."""
    w1, b1, w2, b2, w3, b3, wc, bc = params
    n, f_in = x.shape
    num_classes = wc.shape[1]
    emb_dim = w3.shape[1]

    n_pad = _round_up(n, 128)
    f_pad = _round_up(f_in, 128)

    # bf16 MXU operands (zero-padded to lane-dense widths); biases stay f32.
    a_p = _pad2(a_hat, n_pad, n_pad, jnp.bfloat16)
    x_p = _pad2(x, n_pad, f_pad, jnp.bfloat16)
    w1_p = _pad2(w1, f_pad, LANE, jnp.bfloat16)
    w2_p = _pad2(w2, LANE, LANE, jnp.bfloat16)
    w3_p = _pad2(w3, LANE, LANE, jnp.bfloat16)
    wc_p = _pad2(wc, LANE, LANE, jnp.bfloat16)
    b1_p = _pad2(b1, 1, LANE, jnp.float32)
    b2_p = _pad2(b2, 1, LANE, jnp.float32)
    b3_p = _pad2(b3, 1, LANE, jnp.float32)
    bc_p = _pad2(bc, 1, LANE, jnp.float32)

    inputs = (a_p, x_p, w1_p, b1_p, w2_p, b2_p, w3_p, b3_p, wc_p, bc_p)

    flops = (2 * n_pad * f_pad * LANE            # X @ W1
             + 3 * 2 * n_pad * n_pad * LANE      # three A_hat @ Z
             + 3 * 2 * n_pad * LANE * LANE)      # H @ W2, H @ W3, H @ Wc
    transcendentals = 3 * n_pad * LANE           # tanh
    bytes_accessed = (sum(int(t.size) * t.dtype.itemsize for t in inputs)
                      + 2 * n_pad * LANE * 4)    # two f32 outputs

    out_shapes = (
        jax.ShapeDtypeStruct((n_pad, LANE), jnp.float32),  # padded logits
        jax.ShapeDtypeStruct((n_pad, LANE), jnp.float32),  # padded embedding
    )

    out_p, h_p = pl.pallas_call(
        gcn_forward_kernel,
        out_shape=out_shapes,
        in_specs=[pl.BlockSpec(memory_space=pltpu.MemorySpace.VMEM)
                  for _ in range(len(inputs))],
        out_specs=(pl.BlockSpec(memory_space=pltpu.MemorySpace.VMEM),
                   pl.BlockSpec(memory_space=pltpu.MemorySpace.VMEM)),
        cost_estimate=pl.CostEstimate(flops=flops,
                                      transcendentals=transcendentals,
                                      bytes_accessed=bytes_accessed),
    )(*inputs)

    return out_p[:n, :num_classes], h_p[:n, :emb_dim]


def build_normalized_adjacency(edge_index, num_nodes):
    """Dense D^{-1/2} (A + I) D^{-1/2} from a [2, E] edge_index (glue, plain JAX)."""
    src, dst = edge_index[0], edge_index[1]
    adj = jnp.zeros((num_nodes, num_nodes), jnp.float32).at[dst, src].set(1.0)
    # Force the diagonal to exactly 1 (GCNConv add_remaining_self_loops with unit
    # edge weights).  This also neutralizes spurious (0, 0) entries coming from a
    # padded jnp.nonzero edge list, which previously double-counted node 0's
    # self-loop and corrupted its normalization.
    eye = jnp.eye(num_nodes, dtype=bool)
    adj = jnp.where(eye, 1.0, adj)
    deg = adj.sum(axis=1)
    d_inv_sqrt = jnp.where(deg > 0, 1.0 / jnp.sqrt(deg), 0.0)
    return d_inv_sqrt[:, None] * adj * d_inv_sqrt[None, :]


def init_params(key, num_features, num_classes):
    """Deterministic synthetic parameters matching the module's __init__ shapes."""
    dims = [(num_features, 4), (4, 4), (4, 2)]               # conv1, conv2, conv3
    keys = jax.random.split(key, 4)
    params = []
    for k, (fi, fo) in zip(keys[:3], dims):
        scale = 1.0 / jnp.sqrt(jnp.float32(fi))
        w = scale * jax.random.normal(k, (fi, fo), jnp.float32)
        b = jnp.zeros((1, fo), jnp.float32)
        params.extend([w, b])
    scale = 1.0 / jnp.sqrt(jnp.float32(2))
    wc = scale * jax.random.normal(keys[3], (2, num_classes), jnp.float32)
    bc = jnp.zeros((1, num_classes), jnp.float32)
    params.extend([wc, bc])
    return tuple(params)


def gcn_forward_ref(a_hat, x, params):
    """Pure-JAX f32 reference for numerics checking."""
    w1, b1, w2, b2, w3, b3, wc, bc = params
    h = jnp.tanh(a_hat @ (x @ w1) + b1)
    h = jnp.tanh(a_hat @ (h @ w2) + b2)
    h = jnp.tanh(a_hat @ (h @ w3) + b3)
    out = h @ wc + bc
    return out, h


if __name__ == "__main__":
    # KarateClub-like synthetic problem: 34 nodes, one-hot node features, 4 classes.
    N = 34
    NUM_FEATURES = 34
    NUM_CLASSES = 4

    key = jax.random.PRNGKey(0)
    k_adj, k_params = jax.random.split(key)

    # Deterministic random undirected graph (stand-in for KarateClub edge_index).
    upper = jnp.triu(jax.random.bernoulli(k_adj, 0.15, (N, N)), k=1)
    adj_sym = (upper | upper.T)
    src, dst = jnp.nonzero(adj_sym, size=N * N, fill_value=0)
    edge_index = jnp.stack([src, dst], axis=0)  # [2, E]; padded (0,0) pairs are
                                                # handled in build_normalized_adjacency.

    a_hat = build_normalized_adjacency(edge_index, N)
    x = jnp.eye(N, NUM_FEATURES, dtype=jnp.float32)  # KarateClub features: one-hot ids

    params = init_params(k_params, NUM_FEATURES, NUM_CLASSES)

    out, h = gcn_forward(a_hat, x, params)
    jax.block_until_ready((out, h))

    assert out.shape == (N, NUM_CLASSES) and h.shape == (N, 2)
    assert bool(jnp.all(jnp.isfinite(out))) and bool(jnp.all(jnp.isfinite(h)))

    # Numerics check against the f32 reference (bf16 MXU operands -> loose tol).
    out_ref, h_ref = gcn_forward_ref(a_hat, x, params)
    assert bool(jnp.allclose(out, out_ref, rtol=5e-2, atol=5e-2))
    assert bool(jnp.allclose(h, h_ref, rtol=5e-2, atol=5e-2))

    print("KERNEL_OK")
</pallas_src>

<mosaic_0001>
module attributes {stable_mosaic.version = 11 : i64} {
  func.func @gcn_forward_kernel(%arg0: memref<128x128xbf16, #tpu.memory_space<vmem>>, %arg1: memref<128x128xbf16, #tpu.memory_space<vmem>>, %arg2: memref<128x128xbf16, #tpu.memory_space<vmem>>, %arg3: memref<1x128xf32, #tpu.memory_space<vmem>>, %arg4: memref<128x128xbf16, #tpu.memory_space<vmem>>, %arg5: memref<1x128xf32, #tpu.memory_space<vmem>>, %arg6: memref<128x128xbf16, #tpu.memory_space<vmem>>, %arg7: memref<1x128xf32, #tpu.memory_space<vmem>>, %arg8: memref<128x128xbf16, #tpu.memory_space<vmem>>, %arg9: memref<1x128xf32, #tpu.memory_space<vmem>>, %arg10: memref<128x128xf32, #tpu.memory_space<vmem>>, %arg11: memref<128x128xf32, #tpu.memory_space<vmem>>) attributes {dimension_semantics = [], scalar_prefetch = 0 : i64, scratch_operands = 0 : i64, tpu.core_type = #tpu.core_type<tc>} {
    %c0 = arith.constant 0 : index
    %c0_0 = arith.constant 0 : index
    %0 = vector.load %arg0[%c0, %c0_0] : memref<128x128xbf16, #tpu.memory_space<vmem>>, vector<128x128xbf16>
    %c0_1 = arith.constant 0 : index
    %c0_2 = arith.constant 0 : index
    %1 = vector.load %arg1[%c0_1, %c0_2] : memref<128x128xbf16, #tpu.memory_space<vmem>>, vector<128x128xbf16>
    %c0_3 = arith.constant 0 : index
    %c0_4 = arith.constant 0 : index
    %2 = vector.load %arg2[%c0_3, %c0_4] : memref<128x128xbf16, #tpu.memory_space<vmem>>, vector<128x128xbf16>
    %cst = arith.constant dense<0.000000e+00> : vector<128x128xf32>
    %3 = tpu.matmul %1, %2, %cst {dimension_numbers = #tpu.dot_dimension_numbers<[1], [0], [0], [1], [0, 0, 1, 1], [], []>} : vector<128x128xbf16>, vector<128x128xbf16>, vector<128x128xf32> -> vector<128x128xf32>
    %4 = arith.truncf %3 : vector<128x128xf32> to vector<128x128xbf16>
    %cst_5 = arith.constant dense<0.000000e+00> : vector<128x128xf32>
    %5 = tpu.matmul %0, %4, %cst_5 {dimension_numbers = #tpu.dot_dimension_numbers<[1], [0], [0], [1], [0, 0, 1, 1], [], []>} : vector<128x128xbf16>, vector<128x128xbf16>, vector<128x128xf32> -> vector<128x128xf32>
    %c0_6 = arith.constant 0 : index
    %c0_7 = arith.constant 0 : index
    %6 = vector.load %arg3[%c0_6, %c0_7] : memref<1x128xf32, #tpu.memory_space<vmem>>, vector<1x128xf32>
    %7 = vector.broadcast %6 : vector<1x128xf32> to vector<128x128xf32>
    %8 = arith.addf %5, %7 : vector<128x128xf32>
    %9 = math.tanh %8 : vector<128x128xf32>
    %10 = arith.truncf %9 : vector<128x128xf32> to vector<128x128xbf16>
    %c0_8 = arith.constant 0 : index
    %c0_9 = arith.constant 0 : index
    %11 = vector.load %arg4[%c0_8, %c0_9] : memref<128x128xbf16, #tpu.memory_space<vmem>>, vector<128x128xbf16>
    %cst_10 = arith.constant dense<0.000000e+00> : vector<128x128xf32>
    %12 = tpu.matmul %10, %11, %cst_10 {dimension_numbers = #tpu.dot_dimension_numbers<[1], [0], [0], [1], [0, 0, 1, 1], [], []>} : vector<128x128xbf16>, vector<128x128xbf16>, vector<128x128xf32> -> vector<128x128xf32>
    %13 = arith.truncf %12 : vector<128x128xf32> to vector<128x128xbf16>
    %cst_11 = arith.constant dense<0.000000e+00> : vector<128x128xf32>
    %14 = tpu.matmul %0, %13, %cst_11 {dimension_numbers = #tpu.dot_dimension_numbers<[1], [0], [0], [1], [0, 0, 1, 1], [], []>} : vector<128x128xbf16>, vector<128x128xbf16>, vector<128x128xf32> -> vector<128x128xf32>
    %c0_12 = arith.constant 0 : index
    %c0_13 = arith.constant 0 : index
    %15 = vector.load %arg5[%c0_12, %c0_13] : memref<1x128xf32, #tpu.memory_space<vmem>>, vector<1x128xf32>
    %16 = vector.broadcast %15 : vector<1x128xf32> to vector<128x128xf32>
    %17 = arith.addf %14, %16 : vector<128x128xf32>
    %18 = math.tanh %17 : vector<128x128xf32>
    %19 = arith.truncf %18 : vector<128x128xf32> to vector<128x128xbf16>
    %c0_14 = arith.constant 0 : index
    %c0_15 = arith.constant 0 : index
    %20 = vector.load %arg6[%c0_14, %c0_15] : memref<128x128xbf16, #tpu.memory_space<vmem>>, vector<128x128xbf16>
    %cst_16 = arith.constant dense<0.000000e+00> : vector<128x128xf32>
    %21 = tpu.matmul %19, %20, %cst_16 {dimension_numbers = #tpu.dot_dimension_numbers<[1], [0], [0], [1], [0, 0, 1, 1], [], []>} : vector<128x128xbf16>, vector<128x128xbf16>, vector<128x128xf32> -> vector<128x128xf32>
    %22 = arith.truncf %21 : vector<128x128xf32> to vector<128x128xbf16>
    %cst_17 = arith.constant dense<0.000000e+00> : vector<128x128xf32>
    %23 = tpu.matmul %0, %22, %cst_17 {dimension_numbers = #tpu.dot_dimension_numbers<[1], [0], [0], [1], [0, 0, 1, 1], [], []>} : vector<128x128xbf16>, vector<128x128xbf16>, vector<128x128xf32> -> vector<128x128xf32>
    %c0_18 = arith.constant 0 : index
    %c0_19 = arith.constant 0 : index
    %24 = vector.load %arg7[%c0_18, %c0_19] : memref<1x128xf32, #tpu.memory_space<vmem>>, vector<1x128xf32>
    %25 = vector.broadcast %24 : vector<1x128xf32> to vector<128x128xf32>
    %26 = arith.addf %23, %25 : vector<128x128xf32>
    %27 = math.tanh %26 : vector<128x128xf32>
    %c0_20 = arith.constant 0 : index
    %c0_21 = arith.constant 0 : index
    %28 = vector.load %arg11[%c0_20, %c0_21] : memref<128x128xf32, #tpu.memory_space<vmem>>, vector<128x128xf32>
    tpu.vector_store %arg11[%c0_20, %c0_21], %27 {strides = array<i32>} : memref<128x128xf32, #tpu.memory_space<vmem>>, vector<128x128xf32>,
    %29 = arith.truncf %27 : vector<128x128xf32> to vector<128x128xbf16>
    %c0_22 = arith.constant 0 : index
    %c0_23 = arith.constant 0 : index
    %30 = vector.load %arg8[%c0_22, %c0_23] : memref<128x128xbf16, #tpu.memory_space<vmem>>, vector<128x128xbf16>
    %cst_24 = arith.constant dense<0.000000e+00> : vector<128x128xf32>
    %31 = tpu.matmul %29, %30, %cst_24 {dimension_numbers = #tpu.dot_dimension_numbers<[1], [0], [0], [1], [0, 0, 1, 1], [], []>} : vector<128x128xbf16>, vector<128x128xbf16>, vector<128x128xf32> -> vector<128x128xf32>
    %c0_25 = arith.constant 0 : index
    %c0_26 = arith.constant 0 : index
    %32 = vector.load %arg9[%c0_25, %c0_26] : memref<1x128xf32, #tpu.memory_space<vmem>>, vector<1x128xf32>
    %33 = vector.broadcast %32 : vector<1x128xf32> to vector<128x128xf32>
    %34 = arith.addf %31, %33 : vector<128x128xf32>
    %c0_27 = arith.constant 0 : index
    %c0_28 = arith.constant 0 : index
    %35 = vector.load %arg10[%c0_27, %c0_28] : memref<128x128xf32, #tpu.memory_space<vmem>>, vector<128x128xf32>
    tpu.vector_store %arg10[%c0_27, %c0_28], %34 {strides = array<i32>} : memref<128x128xf32, #tpu.memory_space<vmem>>, vector<128x128xf32>,
    return
  }
}

</mosaic_0001>

<llo_original>
// kernel: tpu_custom_call.1
$region0: #{tpu_custom_call.1}
  #allocation0 [shape = 'u32[]', space=smem, size = 0x4, offset = 0x4, fixed_abs, tag = 'smem constant byte address 0x4 - core index']
  #allocation1 [shape = 'u32[72,128]{1,0:T(1,128)}', space=vmem, size = 0x9000, scoped, tag = 'internal scratch']
  %s0 = inlined_call_operand.hbm [shape: bf16[128,128], index: 0, kind: input, shape index: {}]
  %s1 = inlined_call_operand.hbm [shape: bf16[128,128], index: 1, kind: input, shape index: {}]
  %s2 = inlined_call_operand.hbm [shape: bf16[128,128], index: 2, kind: input, shape index: {}]
  %s3 = inlined_call_operand.vmem [shape: f32[1,128], index: 3, kind: input, shape index: {}]
  %s4 = inlined_call_operand.hbm [shape: bf16[128,128], index: 4, kind: input, shape index: {}]
  %s5 = inlined_call_operand.vmem [shape: f32[1,128], index: 5, kind: input, shape index: {}]
  %s6 = inlined_call_operand.hbm [shape: bf16[128,128], index: 6, kind: input, shape index: {}]
  %s7 = inlined_call_operand.vmem [shape: f32[1,128], index: 7, kind: input, shape index: {}]
  %s8 = inlined_call_operand.hbm [shape: bf16[128,128], index: 8, kind: input, shape index: {}]
  %s9 = inlined_call_operand.vmem [shape: f32[1,128], index: 9, kind: input, shape index: {}]
  %s10 = inlined_call_operand.hbm [shape: f32[128,128], index: 10, kind: output, shape index: {0}]
  %s11 = inlined_call_operand.hbm [shape: f32[128,128], index: 11, kind: output, shape index: {1}]
  %12 = xla_tuple %s10, %s11
  %s13 = sld [smem:[#allocation0]]
  $region82: #{tpu_custom_call.1} parent=0
    _
  %s15 = ssub.s32 1, %s13
  %s16 = scalar_select 0, %s15, %s13
  $region1: #{tpu_custom_call.1} parent=0
    #allocation2 [shape = 'u8[32768]{0}', space=vmem, size = 0x8000, scoped, tag = 'input window, operand 0, single buffered']
    #allocation3 [shape = 's32[1]{0}', space=sflag, size = 0x4, scoped, tag = 'scoped memory for tpu_custom_call.1']
    #allocation4 [shape = 's32[1]{0}', space=sflag, size = 0x4, scoped, tag = 'scoped memory for tpu_custom_call.1']
    #allocation5 [shape = 'u8[32768]{0}', space=vmem, size = 0x8000, scoped, tag = 'input window, operand 1, single buffered']
    #allocation6 [shape = 's32[1]{0}', space=sflag, size = 0x4, scoped, tag = 'scoped memory for tpu_custom_call.1']
    #allocation7 [shape = 'u8[32768]{0}', space=vmem, size = 0x8000, scoped, tag = 'input window, operand 2, single buffered']
    #allocation8 [shape = 'u8[32768]{0}', space=vmem, size = 0x8000, scoped, tag = 'input window, operand 4, single buffered']
    #allocation9 [shape = 's32[1]{0}', space=sflag, size = 0x4, scoped, tag = 'scoped memory for tpu_custom_call.1']
    #allocation10 [shape = 'u8[32768]{0}', space=vmem, size = 0x8000, scoped, tag = 'input window, operand 6, single buffered']
    #allocation11 [shape = 'u8[32768]{0}', space=vmem, size = 0x8000, scoped, tag = 'input window, operand 8, single buffered']
    #allocation12 [shape = 's32[1]{0}', space=sflag, size = 0x4, scoped, tag = 'scoped memory for tpu_custom_call.1']
    #allocation13 [shape = 'u8[65536]{0}', space=vmem, size = 0x10000, scoped, tag = 'output window, operand 0, single buffered']
    #allocation14 [shape = 'u8[65536]{0}', space=vmem, size = 0x10000, scoped, tag = 'output window, operand 1, single buffered']
    #allocation15 [shape = 's32[1]{0}', space=sflag, size = 0x4, scoped, tag = 'scoped memory for tpu_custom_call.1']
    %17 = vsyncpa [#allocation3], 0
    %18 = vsyncpa [#allocation6], 0
    %19 = vsyncpa [#allocation9], 0
    %20 = vsyncpa [#allocation12], 0
    %21 = vsyncpa [#allocation4], 0
    %22 = vsyncpa [#allocation15], 0
    // Predicated region
    $region2: #{tpu_custom_call.1} parent=1 // pred_check
      _
    $region3: #{tpu_custom_call.1} parent=1 // pred_check_branch
      %24 = sbr.rel (0) target = $region5
    $region4: #{tpu_custom_call.1} parent=1 // pred_region
      %26 = vsyncadd [#allocation3], 0
      %s27 = sshll.u32 %s0, 4
      %s28 = int_to_ptr.hbm [resolvable:$true] %s27
      %s29 = sshll.u32 [#allocation2], 4
      %s30 = int_to_ptr.vmem [resolvable:$true] %s29
      %35 = dma.hbm_to_vmem [thread:$0]  %s28, 1024, %s30, [#allocation3], 64, 64, 4
    $region5: #{tpu_custom_call.1} parent=1 // pred_fallthru
      _
    // Predicated region
    $region6: #{tpu_custom_call.1} parent=1 // pred_check
      _
    $region7: #{tpu_custom_call.1} parent=1 // pred_check_branch
      %37 = sbr.rel (0) target = $region9
    $region8: #{tpu_custom_call.1} parent=1 // pred_region
      %39 = vsyncadd [#allocation6], 0
      %s40 = sshll.u32 %s1, 4
      %s41 = int_to_ptr.hbm [resolvable:$true] %s40
      %s42 = sshll.u32 [#allocation5], 4
      %s43 = int_to_ptr.vmem [resolvable:$true] %s42
      %48 = dma.hbm_to_vmem [thread:$0]  %s41, 1024, %s43, [#allocation6], 64, 64, 4
    $region9: #{tpu_custom_call.1} parent=1 // pred_fallthru
      _
    // Predicated region
    $region10: #{tpu_custom_call.1} parent=1 // pred_check
      _
    $region11: #{tpu_custom_call.1} parent=1 // pred_check_branch
      %50 = sbr.rel (0) target = $region13
    $region12: #{tpu_custom_call.1} parent=1 // pred_region
      %52 = vsyncadd [#allocation6], 0
      %s53 = sshll.u32 %s2, 4
      %s54 = int_to_ptr.hbm [resolvable:$true] %s53
      %s55 = sshll.u32 [#allocation7], 4
      %s56 = int_to_ptr.vmem [resolvable:$true] %s55
      %61 = dma.hbm_to_vmem [thread:$0]  %s54, 1024, %s56, [#allocation6], 64, 64, 4
    $region13: #{tpu_custom_call.1} parent=1 // pred_fallthru
      _
    // Predicated region
    $region14: #{tpu_custom_call.1} parent=1 // pred_check
      _
    $region15: #{tpu_custom_call.1} parent=1 // pred_check_branch
      %63 = sbr.rel (0) target = $region17
    $region16: #{tpu_custom_call.1} parent=1 // pred_region
      _
    $region17: #{tpu_custom_call.1} parent=1 // pred_fallthru
      _
    // Predicated region
    $region18: #{tpu_custom_call.1} parent=1 // pred_check
      _
    $region19: #{tpu_custom_call.1} parent=1 // pred_check_branch
      %65 = sbr.rel (0) target = $region21
    $region20: #{tpu_custom_call.1} parent=1 // pred_region
      %67 = vsyncadd [#allocation9], 0
      %s68 = sshll.u32 %s4, 4
      %s69 = int_to_ptr.hbm [resolvable:$true] %s68
      %s70 = sshll.u32 [#allocation8], 4
      %s71 = int_to_ptr.vmem [resolvable:$true] %s70
      %76 = dma.hbm_to_vmem [thread:$0]  %s69, 1024, %s71, [#allocation9], 64, 64, 4
    $region21: #{tpu_custom_call.1} parent=1 // pred_fallthru
      _
    // Predicated region
    $region22: #{tpu_custom_call.1} parent=1 // pred_check
      _
    $region23: #{tpu_custom_call.1} parent=1 // pred_check_branch
      %78 = sbr.rel (0) target = $region25
    $region24: #{tpu_custom_call.1} parent=1 // pred_region
      _
    $region25: #{tpu_custom_call.1} parent=1 // pred_fallthru
      _
    // Predicated region
    $region26: #{tpu_custom_call.1} parent=1 // pred_check
      _
    $region27: #{tpu_custom_call.1} parent=1 // pred_check_branch
      %80 = sbr.rel (0) target = $region29
    $region28: #{tpu_custom_call.1} parent=1 // pred_region
      %82 = vsyncadd [#allocation9], 0
      %s83 = sshll.u32 %s6, 4
      %s84 = int_to_ptr.hbm [resolvable:$true] %s83
      %s85 = sshll.u32 [#allocation10], 4
      %s86 = int_to_ptr.vmem [resolvable:$true] %s85
      %91 = dma.hbm_to_vmem [thread:$0]  %s84, 1024, %s86, [#allocation9], 64, 64, 4
    $region29: #{tpu_custom_call.1} parent=1 // pred_fallthru
      _
    // Predicated region
    $region30: #{tpu_custom_call.1} parent=1 // pred_check
      _
    $region31: #{tpu_custom_call.1} parent=1 // pred_check_branch
      %93 = sbr.rel (0) target = $region33
    $region32: #{tpu_custom_call.1} parent=1 // pred_region
      _
    $region33: #{tpu_custom_call.1} parent=1 // pred_fallthru
      _
    // Predicated region
    $region34: #{tpu_custom_call.1} parent=1 // pred_check
      _
    $region35: #{tpu_custom_call.1} parent=1 // pred_check_branch
      %95 = sbr.rel (0) target = $region37
    $region36: #{tpu_custom_call.1} parent=1 // pred_region
      %97 = vsyncadd [#allocation12], 0
      %s98 = sshll.u32 %s8, 4
      %s99 = int_to_ptr.hbm [resolvable:$true] %s98
      %s100 = sshll.u32 [#allocation11], 4
      %s101 = int_to_ptr.vmem [resolvable:$true] %s100
      %106 = dma.hbm_to_vmem [thread:$0]  %s99, 1024, %s101, [#allocation12], 64, 64, 4
    $region37: #{tpu_custom_call.1} parent=1 // pred_fallthru
      _
    // Predicated region
    $region38: #{tpu_custom_call.1} parent=1 // pred_check
      _
    $region39: #{tpu_custom_call.1} parent=1 // pred_check_branch
      %108 = sbr.rel (0) target = $region41
    $region40: #{tpu_custom_call.1} parent=1 // pred_region
      _
    $region41: #{tpu_custom_call.1} parent=1 // pred_fallthru
      _
    // Predicated region
    $region42: #{tpu_custom_call.1} parent=1 // pred_check
      _
    $region43: #{tpu_custom_call.1} parent=1 // pred_check_branch
      %110 = sbr.rel (0) target = $region45
    $region44: #{tpu_custom_call.1} parent=1 // pred_region
      %112 = dma.done [#allocation3], 1024
    $region45: #{tpu_custom_call.1} parent=1 // pred_fallthru
      _
    // Predicated region
    $region46: #{tpu_custom_call.1} parent=1 // pred_check
      _
    $region47: #{tpu_custom_call.1} parent=1 // pred_check_branch
      %114 = sbr.rel (0) target = $region49
    $region48: #{tpu_custom_call.1} parent=1 // pred_region
      %116 = dma.done [#allocation6], 1024
    $region49: #{tpu_custom_call.1} parent=1 // pred_fallthru
      _
    // Predicated region
    $region50: #{tpu_custom_call.1} parent=1 // pred_check
      _
    $region51: #{tpu_custom_call.1} parent=1 // pred_check_branch
      %118 = sbr.rel (0) target = $region53
    $region52: #{tpu_custom_call.1} parent=1 // pred_region
      %120 = dma.done [#allocation6], 1024
    $region53: #{tpu_custom_call.1} parent=1 // pred_fallthru
      _
    // Predicated region
    $region54: #{tpu_custom_call.1} parent=1 // pred_check
      _
    $region55: #{tpu_custom_call.1} parent=1 // pred_check_branch
      %122 = sbr.rel (0) target = $region57
    $region56: #{tpu_custom_call.1} parent=1 // pred_region
      %124 = dma.done [#allocation9], 1024
    $region57: #{tpu_custom_call.1} parent=1 // pred_fallthru
      _
    // Predicated region
    $region58: #{tpu_custom_call.1} parent=1 // pred_check
      _
    $region59: #{tpu_custom_call.1} parent=1 // pred_check_branch
      %126 = sbr.rel (0) target = $region61
    $region60: #{tpu_custom_call.1} parent=1 // pred_region
      %128 = dma.done [#allocation9], 1024
    $region61: #{tpu_custom_call.1} parent=1 // pred_fallthru
      _
    // Predicated region
    $region62: #{tpu_custom_call.1} parent=1 // pred_check
      _
    $region63: #{tpu_custom_call.1} parent=1 // pred_check_branch
      %130 = sbr.rel (0) target = $region65
    $region64: #{tpu_custom_call.1} parent=1 // pred_region
      %132 = dma.done [#allocation12], 1024
    $region65: #{tpu_custom_call.1} parent=1 // pred_fallthru
      _
    %v133 = vld [vmem:[#allocation2] sm:$0xf]
    %v134 = vld [vmem:[#allocation2 + $0x4] sm:$0xf]
    %v135 = vld [vmem:[#allocation2 + $0x8] sm:$0xf]
    %v136 = vld [vmem:[#allocation2 + $0xc] sm:$0xf]
    %v137 = vld [vmem:[#allocation2 + $0x10] sm:$0xf]
    %v138 = vld [vmem:[#allocation2 + $0x14] sm:$0xf]
    %v139 = vld [vmem:[#allocation2 + $0x18] sm:$0xf]
    %v140 = vld [vmem:[#allocation2 + $0x1c] sm:$0xf]
    %v141 = vld [vmem:[#allocation2 + $0x20] sm:$0xf]
    %v142 = vld [vmem:[#allocation2 + $0x24] sm:$0xf]
    %v143 = vld [vmem:[#allocation2 + $0x28] sm:$0xf]
    %v144 = vld [vmem:[#allocation2 + $0x2c] sm:$0xf]
    %v145 = vld [vmem:[#allocation2 + $0x30] sm:$0xf]
    %v146 = vld [vmem:[#allocation2 + $0x34] sm:$0xf]
    %v147 = vld [vmem:[#allocation2 + $0x38] sm:$0xf]
    %v148 = vld [vmem:[#allocation2 + $0x3c] sm:$0xf]
    %v149 = vld [vmem:[#allocation5] sm:$0xf]
    %v150 = vld [vmem:[#allocation5 + $0x4] sm:$0xf]
    %v151 = vld [vmem:[#allocation5 + $0x8] sm:$0xf]
    %v152 = vld [vmem:[#allocation5 + $0xc] sm:$0xf]
    %v153 = vld [vmem:[#allocation5 + $0x10] sm:$0xf]
    %v154 = vld [vmem:[#allocation5 + $0x14] sm:$0xf]
    %v155 = vld [vmem:[#allocation5 + $0x18] sm:$0xf]
    %v156 = vld [vmem:[#allocation5 + $0x1c] sm:$0xf]
    %v157 = vld [vmem:[#allocation5 + $0x20] sm:$0xf]
    %v158 = vld [vmem:[#allocation5 + $0x24] sm:$0xf]
    %v159 = vld [vmem:[#allocation5 + $0x28] sm:$0xf]
    %v160 = vld [vmem:[#allocation5 + $0x2c] sm:$0xf]
    %v161 = vld [vmem:[#allocation5 + $0x30] sm:$0xf]
    %v162 = vld [vmem:[#allocation5 + $0x34] sm:$0xf]
    %v163 = vld [vmem:[#allocation5 + $0x38] sm:$0xf]
    %v164 = vld [vmem:[#allocation5 + $0x3c] sm:$0xf]
    %v165 = vld [vmem:[#allocation7] sm:$0xf]
    %v166 = vld [vmem:[#allocation7 + $0x4] sm:$0xf]
    %v167 = vld [vmem:[#allocation7 + $0x8] sm:$0xf]
    %v168 = vld [vmem:[#allocation7 + $0xc] sm:$0xf]
    %v169 = vld [vmem:[#allocation7 + $0x10] sm:$0xf]
    %v170 = vld [vmem:[#allocation7 + $0x14] sm:$0xf]
    %v171 = vld [vmem:[#allocation7 + $0x18] sm:$0xf]
    %v172 = vld [vmem:[#allocation7 + $0x1c] sm:$0xf]
    %v173 = vld [vmem:[#allocation7 + $0x20] sm:$0xf]
    %v174 = vld [vmem:[#allocation7 + $0x24] sm:$0xf]
    %v175 = vld [vmem:[#allocation7 + $0x28] sm:$0xf]
    %v176 = vld [vmem:[#allocation7 + $0x2c] sm:$0xf]
    %v177 = vld [vmem:[#allocation7 + $0x30] sm:$0xf]
    %v178 = vld [vmem:[#allocation7 + $0x34] sm:$0xf]
    %v179 = vld [vmem:[#allocation7 + $0x38] sm:$0xf]
    %v180 = vld [vmem:[#allocation7 + $0x3c] sm:$0xf]
    %v197 = vunpack.c.l.b16 %v149
    %v198 = vunpack.c.l.b16 %v150
    %v199 = vunpack.c.l.b16 %v151
    %v200 = vunpack.c.l.b16 %v152
    %v201 = vunpack.c.l.b16 %v153
    %v202 = vunpack.c.l.b16 %v154
    %v203 = vunpack.c.l.b16 %v155
    %v204 = vunpack.c.l.b16 %v156
    %v205 = vunpack.c.l.b16 %v157
    %v206 = vunpack.c.l.b16 %v158
    %v207 = vunpack.c.l.b16 %v159
    %v208 = vunpack.c.l.b16 %v160
    %v209 = vunpack.c.l.b16 %v161
    %v210 = vunpack.c.l.b16 %v162
    %v211 = vunpack.c.l.b16 %v163
    %v212 = vunpack.c.l.b16 %v164
    %v213 = vpack.c.b16 %v198, %v197
    %v214 = vpack.c.b16 %v200, %v199
    %v215 = vpack.c.b16 %v202, %v201
    %v216 = vpack.c.b16 %v204, %v203
    %v217 = vpack.c.b16 %v206, %v205
    %v218 = vpack.c.b16 %v208, %v207
    %v219 = vpack.c.b16 %v210, %v209
    %v220 = vpack.c.b16 %v212, %v211
    %v245 = vunpack.c.l.b16 %v165
    %v246 = vunpack.c.l.b16 %v166
    %v247 = vunpack.c.l.b16 %v167
    %v248 = vunpack.c.l.b16 %v168
    %v249 = vunpack.c.l.b16 %v169
    %v250 = vunpack.c.l.b16 %v170
    %v251 = vunpack.c.l.b16 %v171
    %v252 = vunpack.c.l.b16 %v172
    %v253 = vunpack.c.l.b16 %v173
    %v254 = vunpack.c.l.b16 %v174
    %v255 = vunpack.c.l.b16 %v175
    %v256 = vunpack.c.l.b16 %v176
    %v257 = vunpack.c.l.b16 %v177
    %v258 = vunpack.c.l.b16 %v178
    %v259 = vunpack.c.l.b16 %v179
    %v260 = vunpack.c.l.b16 %v180
    %v261 = vpack.c.b16 %v246, %v245
    %v262 = vpack.c.b16 %v248, %v247
    %v263 = vpack.c.b16 %v250, %v249
    %v264 = vpack.c.b16 %v252, %v251
    %v265 = vpack.c.b16 %v254, %v253
    %v266 = vpack.c.b16 %v256, %v255
    %v267 = vpack.c.b16 %v258, %v257
    %v268 = vpack.c.b16 %v260, %v259
    %277 = vmatpush.bf16.msra.mxu0 %v268
    %278 = vmatpush.bf16.msra.mxu0 %v267
    %279 = vmatpush.bf16.msra.mxu0 %v266
    %280 = vmatpush.bf16.msra.mxu0 %v265
    %281 = vmatpush.bf16.msra.mxu0 %v264
    %282 = vmatpush.bf16.msra.mxu0 %v263
    %283 = vmatpush.bf16.msra.mxu0 %v262
    %284 = vmatpush.bf16.msra.mxu0 %v261
    %285 = vmatmul.bf16.gmra.mxu0 %v213
    %v286 = vpop.f32.mrf.mxu0
    %v287 = vadd.f32 0.0, %v286
    %v288 = vpop.f32.mrf.mxu0
    %v289 = vadd.f32 0.0, %v288
    %290 = vmatmul.bf16.gmra.mxu0 %v214
    %v291 = vpop.f32.mrf.mxu0
    %v292 = vadd.f32 0.0, %v291
    %v293 = vpop.f32.mrf.mxu0
    %v294 = vadd.f32 0.0, %v293
    %295 = vmatmul.bf16.gmra.mxu0 %v215
    %v296 = vpop.f32.mrf.mxu0
    %v297 = vadd.f32 0.0, %v296
    %v298 = vpop.f32.mrf.mxu0
    %v299 = vadd.f32 0.0, %v298
    %300 = vmatmul.bf16.gmra.mxu0 %v216
    %v301 = vpop.f32.mrf.mxu0
    %v302 = vadd.f32 0.0, %v301
    %v303 = vpop.f32.mrf.mxu0
    %v304 = vadd.f32 0.0, %v303
    %305 = vmatmul.bf16.gmra.mxu0 %v217
    %v306 = vpop.f32.mrf.mxu0
    %v307 = vadd.f32 0.0, %v306
    %v308 = vpop.f32.mrf.mxu0
    %v309 = vadd.f32 0.0, %v308
    %310 = vmatmul.bf16.gmra.mxu0 %v218
    %v311 = vpop.f32.mrf.mxu0
    %v312 = vadd.f32 0.0, %v311
    %v313 = vpop.f32.mrf.mxu0
    %v314 = vadd.f32 0.0, %v313
    %315 = vmatmul.bf16.gmra.mxu0 %v219
    %v316 = vpop.f32.mrf.mxu0
    %v317 = vadd.f32 0.0, %v316
    %v318 = vpop.f32.mrf.mxu0
    %v319 = vadd.f32 0.0, %v318
    %320 = vmatmul.bf16.gmra.mxu0 %v220
    %v321 = vpop.f32.mrf.mxu0
    %v322 = vadd.f32 0.0, %v321
    %v323 = vpop.f32.mrf.mxu0
    %v324 = vadd.f32 0.0, %v323
    %325 = vdwg.mxu0
    %v326 = vpack.c.bf16 %v289, %v287
    %v327 = vpack.c.bf16 %v294, %v292
    %v328 = vpack.c.bf16 %v299, %v297
    %v329 = vpack.c.bf16 %v304, %v302
    %v330 = vpack.c.bf16 %v309, %v307
    %v331 = vpack.c.bf16 %v314, %v312
    %v332 = vpack.c.bf16 %v319, %v317
    %v333 = vpack.c.bf16 %v324, %v322
    %v334 = vld [vmem:[%s3] sm:$0x1]
    %v336 = vperm.slane %v334, 0
    %v354 = vunpack.c.l.b16 %v133
    %v355 = vunpack.c.l.b16 %v134
    %v356 = vunpack.c.l.b16 %v135
    %v357 = vunpack.c.l.b16 %v136
    %v358 = vunpack.c.l.b16 %v137
    %v359 = vunpack.c.l.b16 %v138
    %v360 = vunpack.c.l.b16 %v139
    %v361 = vunpack.c.l.b16 %v140
    %v362 = vunpack.c.l.b16 %v141
    %v363 = vunpack.c.l.b16 %v142
    %v364 = vunpack.c.l.b16 %v143
    %v365 = vunpack.c.l.b16 %v144
    %v366 = vunpack.c.l.b16 %v145
    %v367 = vunpack.c.l.b16 %v146
    %v368 = vunpack.c.l.b16 %v147
    %v369 = vunpack.c.l.b16 %v148
    %v370 = vpack.c.b16 %v355, %v354
    %v371 = vpack.c.b16 %v357, %v356
    %v372 = vpack.c.b16 %v359, %v358
    %v373 = vpack.c.b16 %v361, %v360
    %v374 = vpack.c.b16 %v363, %v362
    %v375 = vpack.c.b16 %v365, %v364
    %v376 = vpack.c.b16 %v367, %v366
    %v377 = vpack.c.b16 %v369, %v368
    %386 = vmatpush.bf16.msra.mxu0 %v333
    %387 = vmatpush.bf16.msra.mxu0 %v332
    %388 = vmatpush.bf16.msra.mxu0 %v331
    %389 = vmatpush.bf16.msra.mxu0 %v330
    %390 = vmatpush.bf16.msra.mxu0 %v329
    %391 = vmatpush.bf16.msra.mxu0 %v328
    %392 = vmatpush.bf16.msra.mxu0 %v327
    %393 = vmatpush.bf16.msra.mxu0 %v326
    %394 = vmatmul.bf16.gmra.mxu0 %v370
    %v395 = vpop.f32.mrf.mxu0
    %v396 = vadd.f32 %v336, %v395
    %v397 = vpop.f32.mrf.mxu0
    %v398 = vadd.f32 %v336, %v397
    %399 = vmatmul.bf16.gmra.mxu0 %v371
    %v400 = vpop.f32.mrf.mxu0
    %v401 = vadd.f32 %v336, %v400
    %v402 = vpop.f32.mrf.mxu0
    %v403 = vadd.f32 %v336, %v402
    %404 = vmatmul.bf16.gmra.mxu0 %v372
    %v405 = vpop.f32.mrf.mxu0
    %v406 = vadd.f32 %v336, %v405
    %v407 = vpop.f32.mrf.mxu0
    %v408 = vadd.f32 %v336, %v407
    %409 = vmatmul.bf16.gmra.mxu0 %v373
    %v410 = vpop.f32.mrf.mxu0
    %v411 = vadd.f32 %v336, %v410
    %v412 = vpop.f32.mrf.mxu0
    %v413 = vadd.f32 %v336, %v412
    %414 = vmatmul.bf16.gmra.mxu0 %v374
    %v415 = vpop.f32.mrf.mxu0
    %v416 = vadd.f32 %v336, %v415
    %v417 = vpop.f32.mrf.mxu0
    %v418 = vadd.f32 %v336, %v417
    %419 = vmatmul.bf16.gmra.mxu0 %v375
    %v420 = vpop.f32.mrf.mxu0
    %v421 = vadd.f32 %v336, %v420
    %v422 = vpop.f32.mrf.mxu0
    %v423 = vadd.f32 %v336, %v422
    %424 = vmatmul.bf16.gmra.mxu0 %v376
    %v425 = vpop.f32.mrf.mxu0
    %v426 = vadd.f32 %v336, %v425
    %v427 = vpop.f32.mrf.mxu0
    %v428 = vadd.f32 %v336, %v427
    %429 = vmatmul.bf16.gmra.mxu0 %v377
    %v430 = vpop.f32.mrf.mxu0
    %v431 = vadd.f32 %v336, %v430
    %v432 = vpop.f32.mrf.mxu0
    %v433 = vadd.f32 %v336, %v432
    %434 = vdwg.mxu0
    %v435 = vtanh.pop %v396
    %v436 = vtanh.pop %v398
    %v437 = vtanh.pop %v401
    %v438 = vtanh.pop %v403
    %v439 = vtanh.pop %v406
    %v440 = vtanh.pop %v408
    %v441 = vtanh.pop %v411
    %v442 = vtanh.pop %v413
    %v443 = vtanh.pop %v416
    %v444 = vtanh.pop %v418
    %v445 = vtanh.pop %v421
    %v446 = vtanh.pop %v423
    %v447 = vtanh.pop %v426
    %v448 = vtanh.pop %v428
    %v449 = vtanh.pop %v431
    %v450 = vtanh.pop %v433
    %v451 = vpack.c.bf16 %v436, %v435
    %v452 = vpack.c.bf16 %v438, %v437
    %v453 = vpack.c.bf16 %v440, %v439
    %v454 = vpack.c.bf16 %v442, %v441
    %v455 = vpack.c.bf16 %v444, %v443
    %v456 = vpack.c.bf16 %v446, %v445
    %v457 = vpack.c.bf16 %v448, %v447
    %v458 = vpack.c.bf16 %v450, %v449
    %v459 = vld [vmem:[#allocation8] sm:$0xf]
    %v460 = vld [vmem:[#allocation8 + $0x4] sm:$0xf]
    %v461 = vld [vmem:[#allocation8 + $0x8] sm:$0xf]
    %v462 = vld [vmem:[#allocation8 + $0xc] sm:$0xf]
    %v463 = vld [vmem:[#allocation8 + $0x10] sm:$0xf]
    %v464 = vld [vmem:[#allocation8 + $0x14] sm:$0xf]
    %v465 = vld [vmem:[#allocation8 + $0x18] sm:$0xf]
    %v466 = vld [vmem:[#allocation8 + $0x1c] sm:$0xf]
    %v467 = vld [vmem:[#allocation8 + $0x20] sm:$0xf]
    %v468 = vld [vmem:[#allocation8 + $0x24] sm:$0xf]
    %v469 = vld [vmem:[#allocation8 + $0x28] sm:$0xf]
    %v470 = vld [vmem:[#allocation8 + $0x2c] sm:$0xf]
    %v471 = vld [vmem:[#allocation8 + $0x30] sm:$0xf]
    %v472 = vld [vmem:[#allocation8 + $0x34] sm:$0xf]
    %v473 = vld [vmem:[#allocation8 + $0x38] sm:$0xf]
    %v474 = vld [vmem:[#allocation8 + $0x3c] sm:$0xf]
    %v491 = vunpack.c.l.b16 %v459
    %v492 = vunpack.c.l.b16 %v460
    %v493 = vunpack.c.l.b16 %v461
    %v494 = vunpack.c.l.b16 %v462
    %v495 = vunpack.c.l.b16 %v463
    %v496 = vunpack.c.l.b16 %v464
    %v497 = vunpack.c.l.b16 %v465
    %v498 = vunpack.c.l.b16 %v466
    %v499 = vunpack.c.l.b16 %v467
    %v500 = vunpack.c.l.b16 %v468
    %v501 = vunpack.c.l.b16 %v469
    %v502 = vunpack.c.l.b16 %v470
    %v503 = vunpack.c.l.b16 %v471
    %v504 = vunpack.c.l.b16 %v472
    %v505 = vunpack.c.l.b16 %v473
    %v506 = vunpack.c.l.b16 %v474
    %v507 = vpack.c.b16 %v492, %v491
    %v508 = vpack.c.b16 %v494, %v493
    %v509 = vpack.c.b16 %v496, %v495
    %v510 = vpack.c.b16 %v498, %v497
    %v511 = vpack.c.b16 %v500, %v499
    %v512 = vpack.c.b16 %v502, %v501
    %v513 = vpack.c.b16 %v504, %v503
    %v514 = vpack.c.b16 %v506, %v505
    %523 = vmatpush.bf16.msra.mxu0 %v514
    %524 = vmatpush.bf16.msra.mxu0 %v513
    %525 = vmatpush.bf16.msra.mxu0 %v512
    %526 = vmatpush.bf16.msra.mxu0 %v511
    %527 = vmatpush.bf16.msra.mxu0 %v510
    %528 = vmatpush.bf16.msra.mxu0 %v509
    %529 = vmatpush.bf16.msra.mxu0 %v508
    %530 = vmatpush.bf16.msra.mxu0 %v507
    %531 = vmatmul.bf16.gmra.mxu0 %v451
    %v532 = vpop.f32.mrf.mxu0
    %v533 = vadd.f32 0.0, %v532
    %v534 = vpop.f32.mrf.mxu0
    %v535 = vadd.f32 0.0, %v534
    %536 = vmatmul.bf16.gmra.mxu0 %v452
    %v537 = vpop.f32.mrf.mxu0
    %v538 = vadd.f32 0.0, %v537
    %v539 = vpop.f32.mrf.mxu0
    %v540 = vadd.f32 0.0, %v539
    %541 = vmatmul.bf16.gmra.mxu0 %v453
    %v542 = vpop.f32.mrf.mxu0
    %v543 = vadd.f32 0.0, %v542
    %v544 = vpop.f32.mrf.mxu0
    %v545 = vadd.f32 0.0, %v544
    %546 = vmatmul.bf16.gmra.mxu0 %v454
    %v547 = vpop.f32.mrf.mxu0
    %v548 = vadd.f32 0.0, %v547
    %v549 = vpop.f32.mrf.mxu0
    %v550 = vadd.f32 0.0, %v549
    %551 = vmatmul.bf16.gmra.mxu0 %v455
    %v552 = vpop.f32.mrf.mxu0
    %v553 = vadd.f32 0.0, %v552
    %v554 = vpop.f32.mrf.mxu0
    %v555 = vadd.f32 0.0, %v554
    %556 = vmatmul.bf16.gmra.mxu0 %v456
    %v557 = vpop.f32.mrf.mxu0
    %v558 = vadd.f32 0.0, %v557
    %v559 = vpop.f32.mrf.mxu0
    %v560 = vadd.f32 0.0, %v559
    %561 = vmatmul.bf16.gmra.mxu0 %v457
    %v562 = vpop.f32.mrf.mxu0
    %v563 = vadd.f32 0.0, %v562
    %v564 = vpop.f32.mrf.mxu0
    %v565 = vadd.f32 0.0, %v564
    %566 = vmatmul.bf16.gmra.mxu0 %v458
    %v567 = vpop.f32.mrf.mxu0
    %v568 = vadd.f32 0.0, %v567
    %v569 = vpop.f32.mrf.mxu0
    %v570 = vadd.f32 0.0, %v569
    %571 = vdwg.mxu0
    %v572 = vpack.c.bf16 %v535, %v533
    %v573 = vpack.c.bf16 %v540, %v538
    %v574 = vpack.c.bf16 %v545, %v543
    %v575 = vpack.c.bf16 %v550, %v548
    %v576 = vpack.c.bf16 %v555, %v553
    %v577 = vpack.c.bf16 %v560, %v558
    %v578 = vpack.c.bf16 %v565, %v563
    %v579 = vpack.c.bf16 %v570, %v568
    %v580 = vld [vmem:[%s5] sm:$0x1]
    %v582 = vperm.slane %v580, 0
    %584 = vmatpush.bf16.msra.mxu0 %v579
    %585 = vmatpush.bf16.msra.mxu0 %v578
    %586 = vmatpush.bf16.msra.mxu0 %v577
    %587 = vmatpush.bf16.msra.mxu0 %v576
    %588 = vmatpush.bf16.msra.mxu0 %v575
    %589 = vmatpush.bf16.msra.mxu0 %v574
    %590 = vmatpush.bf16.msra.mxu0 %v573
    %591 = vmatpush.bf16.msra.mxu0 %v572
    %592 = vmatmul.bf16.gmra.mxu0 %v370
    %v593 = vpop.f32.mrf.mxu0
    %v594 = vadd.f32 %v582, %v593
    %v595 = vpop.f32.mrf.mxu0
    %v596 = vadd.f32 %v582, %v595
    %597 = vmatmul.bf16.gmra.mxu0 %v371
    %v598 = vpop.f32.mrf.mxu0
    %v599 = vadd.f32 %v582, %v598
    %v600 = vpop.f32.mrf.mxu0
    %v601 = vadd.f32 %v582, %v600
    %602 = vmatmul.bf16.gmra.mxu0 %v372
    %v603 = vpop.f32.mrf.mxu0
    %v604 = vadd.f32 %v582, %v603
    %v605 = vpop.f32.mrf.mxu0
    %v606 = vadd.f32 %v582, %v605
    %607 = vmatmul.bf16.gmra.mxu0 %v373
    %v608 = vpop.f32.mrf.mxu0
    %v609 = vadd.f32 %v582, %v608
    %v610 = vpop.f32.mrf.mxu0
    %v611 = vadd.f32 %v582, %v610
    %612 = vmatmul.bf16.gmra.mxu0 %v374
    %v613 = vpop.f32.mrf.mxu0
    %v614 = vadd.f32 %v582, %v613
    %v615 = vpop.f32.mrf.mxu0
    %v616 = vadd.f32 %v582, %v615
    %617 = vmatmul.bf16.gmra.mxu0 %v375
    %v618 = vpop.f32.mrf.mxu0
    %v619 = vadd.f32 %v582, %v618
    %v620 = vpop.f32.mrf.mxu0
    %v621 = vadd.f32 %v582, %v620
    %622 = vmatmul.bf16.gmra.mxu0 %v376
    %v623 = vpop.f32.mrf.mxu0
    %v624 = vadd.f32 %v582, %v623
    %v625 = vpop.f32.mrf.mxu0
    %v626 = vadd.f32 %v582, %v625
    %627 = vmatmul.bf16.gmra.mxu0 %v377
    %v628 = vpop.f32.mrf.mxu0
    %v629 = vadd.f32 %v582, %v628
    %v630 = vpop.f32.mrf.mxu0
    %v631 = vadd.f32 %v582, %v630
    %632 = vdwg.mxu0
    %v633 = vtanh.pop %v594
    %v634 = vtanh.pop %v596
    %v635 = vtanh.pop %v599
    %v636 = vtanh.pop %v601
    %v637 = vtanh.pop %v604
    %v638 = vtanh.pop %v606
    %v639 = vtanh.pop %v609
    %v640 = vtanh.pop %v611
    %v641 = vtanh.pop %v614
    %v642 = vtanh.pop %v616
    %v643 = vtanh.pop %v619
    %v644 = vtanh.pop %v621
    %v645 = vtanh.pop %v624
    %v646 = vtanh.pop %v626
    %v647 = vtanh.pop %v629
    %v648 = vtanh.pop %v631
    %v649 = vpack.c.bf16 %v634, %v633
    %v650 = vpack.c.bf16 %v636, %v635
    %v651 = vpack.c.bf16 %v638, %v637
    %v652 = vpack.c.bf16 %v640, %v639
    %v653 = vpack.c.bf16 %v642, %v641
    %v654 = vpack.c.bf16 %v644, %v643
    %v655 = vpack.c.bf16 %v646, %v645
    %v656 = vpack.c.bf16 %v648, %v647
    %v657 = vld [vmem:[#allocation10] sm:$0xf]
    %v658 = vld [vmem:[#allocation10 + $0x4] sm:$0xf]
    %v659 = vld [vmem:[#allocation10 + $0x8] sm:$0xf]
    %v660 = vld [vmem:[#allocation10 + $0xc] sm:$0xf]
    %v661 = vld [vmem:[#allocation10 + $0x10] sm:$0xf]
    %v662 = vld [vmem:[#allocation10 + $0x14] sm:$0xf]
    %v663 = vld [vmem:[#allocation10 + $0x18] sm:$0xf]
    %v664 = vld [vmem:[#allocation10 + $0x1c] sm:$0xf]
    %v665 = vld [vmem:[#allocation10 + $0x20] sm:$0xf]
    %v666 = vld [vmem:[#allocation10 + $0x24] sm:$0xf]
    %v667 = vld [vmem:[#allocation10 + $0x28] sm:$0xf]
    %v668 = vld [vmem:[#allocation10 + $0x2c] sm:$0xf]
    %v669 = vld [vmem:[#allocation10 + $0x30] sm:$0xf]
    %v670 = vld [vmem:[#allocation10 + $0x34] sm:$0xf]
    %v671 = vld [vmem:[#allocation10 + $0x38] sm:$0xf]
    %v672 = vld [vmem:[#allocation10 + $0x3c] sm:$0xf]
    %v689 = vunpack.c.l.b16 %v657
    %v690 = vunpack.c.l.b16 %v658
    %v691 = vunpack.c.l.b16 %v659
    %v692 = vunpack.c.l.b16 %v660
    %v693 = vunpack.c.l.b16 %v661
    %v694 = vunpack.c.l.b16 %v662
    %v695 = vunpack.c.l.b16 %v663
    %v696 = vunpack.c.l.b16 %v664
    %v697 = vunpack.c.l.b16 %v665
    %v698 = vunpack.c.l.b16 %v666
    %v699 = vunpack.c.l.b16 %v667
    %v700 = vunpack.c.l.b16 %v668
    %v701 = vunpack.c.l.b16 %v669
    %v702 = vunpack.c.l.b16 %v670
    %v703 = vunpack.c.l.b16 %v671
    %v704 = vunpack.c.l.b16 %v672
    %v705 = vpack.c.b16 %v690, %v689
    %v706 = vpack.c.b16 %v692, %v691
    %v707 = vpack.c.b16 %v694, %v693
    %v708 = vpack.c.b16 %v696, %v695
    %v709 = vpack.c.b16 %v698, %v697
    %v710 = vpack.c.b16 %v700, %v699
    %v711 = vpack.c.b16 %v702, %v701
    %v712 = vpack.c.b16 %v704, %v703
    %721 = vmatpush.bf16.msra.mxu0 %v712
    %722 = vmatpush.bf16.msra.mxu0 %v711
    %723 = vmatpush.bf16.msra.mxu0 %v710
    %724 = vmatpush.bf16.msra.mxu0 %v709
    %725 = vmatpush.bf16.msra.mxu0 %v708
    %726 = vmatpush.bf16.msra.mxu0 %v707
    %727 = vmatpush.bf16.msra.mxu0 %v706
    %728 = vmatpush.bf16.msra.mxu0 %v705
    %729 = vmatmul.bf16.gmra.mxu0 %v649
    %v730 = vpop.f32.mrf.mxu0
    %v731 = vadd.f32 0.0, %v730
    %v732 = vpop.f32.mrf.mxu0
    %v733 = vadd.f32 0.0, %v732
    %734 = vmatmul.bf16.gmra.mxu0 %v650
    %v735 = vpop.f32.mrf.mxu0
    %v736 = vadd.f32 0.0, %v735
    %v737 = vpop.f32.mrf.mxu0
    %v738 = vadd.f32 0.0, %v737
    %739 = vmatmul.bf16.gmra.mxu0 %v651
    %v740 = vpop.f32.mrf.mxu0
    %v741 = vadd.f32 0.0, %v740
    %v742 = vpop.f32.mrf.mxu0
    %v743 = vadd.f32 0.0, %v742
    %744 = vmatmul.bf16.gmra.mxu0 %v652
    %v745 = vpop.f32.mrf.mxu0
    %v746 = vadd.f32 0.0, %v745
    %v747 = vpop.f32.mrf.mxu0
    %v748 = vadd.f32 0.0, %v747
    %749 = vmatmul.bf16.gmra.mxu0 %v653
    %v750 = vpop.f32.mrf.mxu0
    %v751 = vadd.f32 0.0, %v750
    %v752 = vpop.f32.mrf.mxu0
    %v753 = vadd.f32 0.0, %v752
    %754 = vmatmul.bf16.gmra.mxu0 %v654
    %v755 = vpop.f32.mrf.mxu0
    %v756 = vadd.f32 0.0, %v755
    %v757 = vpop.f32.mrf.mxu0
    %v758 = vadd.f32 0.0, %v757
    %759 = vmatmul.bf16.gmra.mxu0 %v655
    %v760 = vpop.f32.mrf.mxu0
    %v761 = vadd.f32 0.0, %v760
    %v762 = vpop.f32.mrf.mxu0
    %v763 = vadd.f32 0.0, %v762
    %764 = vmatmul.bf16.gmra.mxu0 %v656
    %v765 = vpop.f32.mrf.mxu0
    %v766 = vadd.f32 0.0, %v765
    %v767 = vpop.f32.mrf.mxu0
    %v768 = vadd.f32 0.0, %v767
    %769 = vdwg.mxu0
    %v770 = vpack.c.bf16 %v733, %v731
    %v771 = vpack.c.bf16 %v738, %v736
    %v772 = vpack.c.bf16 %v743, %v741
    %v773 = vpack.c.bf16 %v748, %v746
    %v774 = vpack.c.bf16 %v753, %v751
    %v775 = vpack.c.bf16 %v758, %v756
    %v776 = vpack.c.bf16 %v763, %v761
    %v777 = vpack.c.bf16 %v768, %v766
    %v778 = vld [vmem:[%s7] sm:$0x1]
    %v780 = vperm.slane %v778, 0
    %782 = vmatpush.bf16.msra.mxu0 %v777
    %783 = vmatpush.bf16.msra.mxu0 %v776
    %784 = vmatpush.bf16.msra.mxu0 %v775
    %785 = vmatpush.bf16.msra.mxu0 %v774
    %786 = vmatpush.bf16.msra.mxu0 %v773
    %787 = vmatpush.bf16.msra.mxu0 %v772
    %788 = vmatpush.bf16.msra.mxu0 %v771
    %789 = vmatpush.bf16.msra.mxu0 %v770
    %790 = vmatmul.bf16.gmra.mxu0 %v370
    %v791 = vpop.f32.mrf.mxu0
    %v792 = vadd.f32 %v780, %v791
    %v793 = vpop.f32.mrf.mxu0
    %v794 = vadd.f32 %v780, %v793
    %795 = vmatmul.bf16.gmra.mxu0 %v371
    %v796 = vpop.f32.mrf.mxu0
    %v797 = vadd.f32 %v780, %v796
    %v798 = vpop.f32.mrf.mxu0
    %v799 = vadd.f32 %v780, %v798
    %800 = vmatmul.bf16.gmra.mxu0 %v372
    %v801 = vpop.f32.mrf.mxu0
    %v802 = vadd.f32 %v780, %v801
    %v803 = vpop.f32.mrf.mxu0
    %v804 = vadd.f32 %v780, %v803
    %805 = vmatmul.bf16.gmra.mxu0 %v373
    %v806 = vpop.f32.mrf.mxu0
    %v807 = vadd.f32 %v780, %v806
    %v808 = vpop.f32.mrf.mxu0
    %v809 = vadd.f32 %v780, %v808
    %810 = vmatmul.bf16.gmra.mxu0 %v374
    %v811 = vpop.f32.mrf.mxu0
    %v812 = vadd.f32 %v780, %v811
    %v813 = vpop.f32.mrf.mxu0
    %v814 = vadd.f32 %v780, %v813
    %815 = vmatmul.bf16.gmra.mxu0 %v375
    %v816 = vpop.f32.mrf.mxu0
    %v817 = vadd.f32 %v780, %v816
    %v818 = vpop.f32.mrf.mxu0
    %v819 = vadd.f32 %v780, %v818
    %820 = vmatmul.bf16.gmra.mxu0 %v376
    %v821 = vpop.f32.mrf.mxu0
    %v822 = vadd.f32 %v780, %v821
    %v823 = vpop.f32.mrf.mxu0
    %v824 = vadd.f32 %v780, %v823
    %825 = vmatmul.bf16.gmra.mxu0 %v377
    %v826 = vpop.f32.mrf.mxu0
    %v827 = vadd.f32 %v780, %v826
    %v828 = vpop.f32.mrf.mxu0
    %v829 = vadd.f32 %v780, %v828
    %830 = vdwg.mxu0
    %v831 = vtanh.pop %v792
    %v832 = vtanh.pop %v794
    %v833 = vtanh.pop %v797
    %v834 = vtanh.pop %v799
    %v835 = vtanh.pop %v802
    %v836 = vtanh.pop %v804
    %v837 = vtanh.pop %v807
    %v838 = vtanh.pop %v809
    %v839 = vtanh.pop %v812
    %v840 = vtanh.pop %v814
    %v841 = vtanh.pop %v817
    %v842 = vtanh.pop %v819
    %v843 = vtanh.pop %v822
    %v844 = vtanh.pop %v824
    %v845 = vtanh.pop %v827
    %v846 = vtanh.pop %v829
    %847 = vst [vmem:[#allocation14] sm:$0xff] %v831
    %848 = vst [vmem:[#allocation14 + $0x8] sm:$0xff] %v832
    %849 = vst [vmem:[#allocation14 + $0x10] sm:$0xff] %v833
    %850 = vst [vmem:[#allocation14 + $0x18] sm:$0xff] %v834
    %851 = vst [vmem:[#allocation14 + $0x20] sm:$0xff] %v835
    %852 = vst [vmem:[#allocation14 + $0x28] sm:$0xff] %v836
    %853 = vst [vmem:[#allocation14 + $0x30] sm:$0xff] %v837
    %854 = vst [vmem:[#allocation14 + $0x38] sm:$0xff] %v838
    %855 = vst [vmem:[#allocation14 + $0x40] sm:$0xff] %v839
    %856 = vst [vmem:[#allocation14 + $0x48] sm:$0xff] %v840
    %857 = vst [vmem:[#allocation14 + $0x50] sm:$0xff] %v841
    %858 = vst [vmem:[#allocation14 + $0x58] sm:$0xff] %v842
    %859 = vst [vmem:[#allocation14 + $0x60] sm:$0xff] %v843
    %860 = vst [vmem:[#allocation14 + $0x68] sm:$0xff] %v844
    %861 = vst [vmem:[#allocation14 + $0x70] sm:$0xff] %v845
    %862 = vst [vmem:[#allocation14 + $0x78] sm:$0xff] %v846
    %v863 = vpack.c.bf16 %v832, %v831
    %v864 = vpack.c.bf16 %v834, %v833
    %v865 = vpack.c.bf16 %v836, %v835
    %v866 = vpack.c.bf16 %v838, %v837
    %v867 = vpack.c.bf16 %v840, %v839
    %v868 = vpack.c.bf16 %v842, %v841
    %v869 = vpack.c.bf16 %v844, %v843
    %v870 = vpack.c.bf16 %v846, %v845
    %v871 = vld [vmem:[#allocation11] sm:$0xf]
    %v872 = vld [vmem:[#allocation11 + $0x4] sm:$0xf]
    %v873 = vld [vmem:[#allocation11 + $0x8] sm:$0xf]
    %v874 = vld [vmem:[#allocation11 + $0xc] sm:$0xf]
    %v875 = vld [vmem:[#allocation11 + $0x10] sm:$0xf]
    %v876 = vld [vmem:[#allocation11 + $0x14] sm:$0xf]
    %v877 = vld [vmem:[#allocation11 + $0x18] sm:$0xf]
    %v878 = vld [vmem:[#allocation11 + $0x1c] sm:$0xf]
    %v879 = vld [vmem:[#allocation11 + $0x20] sm:$0xf]
    %v880 = vld [vmem:[#allocation11 + $0x24] sm:$0xf]
    %v881 = vld [vmem:[#allocation11 + $0x28] sm:$0xf]
    %v882 = vld [vmem:[#allocation11 + $0x2c] sm:$0xf]
    %v883 = vld [vmem:[#allocation11 + $0x30] sm:$0xf]
    %v884 = vld [vmem:[#allocation11 + $0x34] sm:$0xf]
    %v885 = vld [vmem:[#allocation11 + $0x38] sm:$0xf]
    %v886 = vld [vmem:[#allocation11 + $0x3c] sm:$0xf]
    %v887 = vld [vmem:[%s9] sm:$0x1]
    %v889 = vperm.slane %v887, 0
    %v907 = vunpack.c.l.b16 %v871
    %v908 = vunpack.c.l.b16 %v872
    %v909 = vunpack.c.l.b16 %v873
    %v910 = vunpack.c.l.b16 %v874
    %v911 = vunpack.c.l.b16 %v875
    %v912 = vunpack.c.l.b16 %v876
    %v913 = vunpack.c.l.b16 %v877
    %v914 = vunpack.c.l.b16 %v878
    %v915 = vunpack.c.l.b16 %v879
    %v916 = vunpack.c.l.b16 %v880
    %v917 = vunpack.c.l.b16 %v881
    %v918 = vunpack.c.l.b16 %v882
    %v919 = vunpack.c.l.b16 %v883
    %v920 = vunpack.c.l.b16 %v884
    %v921 = vunpack.c.l.b16 %v885
    %v922 = vunpack.c.l.b16 %v886
    %v923 = vpack.c.b16 %v908, %v907
    %v924 = vpack.c.b16 %v910, %v909
    %v925 = vpack.c.b16 %v912, %v911
    %v926 = vpack.c.b16 %v914, %v913
    %v927 = vpack.c.b16 %v916, %v915
    %v928 = vpack.c.b16 %v918, %v917
    %v929 = vpack.c.b16 %v920, %v919
    %v930 = vpack.c.b16 %v922, %v921
    %939 = vmatpush.bf16.msra.mxu0 %v930
    %940 = vmatpush.bf16.msra.mxu0 %v929
    %941 = vmatpush.bf16.msra.mxu0 %v928
    %942 = vmatpush.bf16.msra.mxu0 %v927
    %943 = vmatpush.bf16.msra.mxu0 %v926
    %944 = vmatpush.bf16.msra.mxu0 %v925
    %945 = vmatpush.bf16.msra.mxu0 %v924
    %946 = vmatpush.bf16.msra.mxu0 %v923
    %947 = vmatmul.bf16.gmra.mxu0 %v863
    %v948 = vpop.f32.mrf.mxu0
    %v949 = vadd.f32 %v889, %v948
    %v950 = vpop.f32.mrf.mxu0
    %v951 = vadd.f32 %v889, %v950
    %952 = vmatmul.bf16.gmra.mxu0 %v864
    %v953 = vpop.f32.mrf.mxu0
    %v954 = vadd.f32 %v889, %v953
    %v955 = vpop.f32.mrf.mxu0
    %v956 = vadd.f32 %v889, %v955
    %957 = vmatmul.bf16.gmra.mxu0 %v865
    %v958 = vpop.f32.mrf.mxu0
    %v959 = vadd.f32 %v889, %v958
    %v960 = vpop.f32.mrf.mxu0
    %v961 = vadd.f32 %v889, %v960
    %962 = vmatmul.bf16.gmra.mxu0 %v866
    %v963 = vpop.f32.mrf.mxu0
    %v964 = vadd.f32 %v889, %v963
    %v965 = vpop.f32.mrf.mxu0
    %v966 = vadd.f32 %v889, %v965
    %967 = vmatmul.bf16.gmra.mxu0 %v867
    %v968 = vpop.f32.mrf.mxu0
    %v969 = vadd.f32 %v889, %v968
    %v970 = vpop.f32.mrf.mxu0
    %v971 = vadd.f32 %v889, %v970
    %972 = vmatmul.bf16.gmra.mxu0 %v868
    %v973 = vpop.f32.mrf.mxu0
    %v974 = vadd.f32 %v889, %v973
    %v975 = vpop.f32.mrf.mxu0
    %v976 = vadd.f32 %v889, %v975
    %977 = vmatmul.bf16.gmra.mxu0 %v869
    %v978 = vpop.f32.mrf.mxu0
    %v979 = vadd.f32 %v889, %v978
    %v980 = vpop.f32.mrf.mxu0
    %v981 = vadd.f32 %v889, %v980
    %982 = vmatmul.bf16.gmra.mxu0 %v870
    %v983 = vpop.f32.mrf.mxu0
    %v984 = vadd.f32 %v889, %v983
    %v985 = vpop.f32.mrf.mxu0
    %v986 = vadd.f32 %v889, %v985
    %987 = vdwg.mxu0
    %988 = vst [vmem:[#allocation13] sm:$0xff] %v949
    %989 = vst [vmem:[#allocation13 + $0x8] sm:$0xff] %v951
    %990 = vst [vmem:[#allocation13 + $0x10] sm:$0xff] %v954
    %991 = vst [vmem:[#allocation13 + $0x18] sm:$0xff] %v956
    %992 = vst [vmem:[#allocation13 + $0x20] sm:$0xff] %v959
    %993 = vst [vmem:[#allocation13 + $0x28] sm:$0xff] %v961
    %994 = vst [vmem:[#allocation13 + $0x30] sm:$0xff] %v964
    %995 = vst [vmem:[#allocation13 + $0x38] sm:$0xff] %v966
    %996 = vst [vmem:[#allocation13 + $0x40] sm:$0xff] %v969
    %997 = vst [vmem:[#allocation13 + $0x48] sm:$0xff] %v971
    %998 = vst [vmem:[#allocation13 + $0x50] sm:$0xff] %v974
    %999 = vst [vmem:[#allocation13 + $0x58] sm:$0xff] %v976
    %1000 = vst [vmem:[#allocation13 + $0x60] sm:$0xff] %v979
    %1001 = vst [vmem:[#allocation13 + $0x68] sm:$0xff] %v981
    %1002 = vst [vmem:[#allocation13 + $0x70] sm:$0xff] %v984
    %1003 = vst [vmem:[#allocation13 + $0x78] sm:$0xff] %v986
    // Predicated region
    $region66: #{tpu_custom_call.1} parent=1 // pred_check
      _
    $region67: #{tpu_custom_call.1} parent=1 // pred_check_branch
      %1005 = sbr.rel (0) target = $region69
    $region68: #{tpu_custom_call.1} parent=1 // pred_region
      %1007 = vsyncadd [#allocation4], 0
      %s1008 = sshll.u32 [#allocation13], 4
      %s1009 = int_to_ptr.vmem [resolvable:$true] %s1008
      %s1010 = sshll.u32 %s10, 4
      %s1011 = int_to_ptr.hbm [resolvable:$true] %s1010
      %1016 = dma.vmem_to_hbm [thread:$0]  %s1009, 2048, %s1011, [#allocation4], 128, 128, 8
    $region69: #{tpu_custom_call.1} parent=1 // pred_fallthru
      _
    // Predicated region
    $region70: #{tpu_custom_call.1} parent=1 // pred_check
      _
    $region71: #{tpu_custom_call.1} parent=1 // pred_check_branch
      %1018 = sbr.rel (0) target = $region73
    $region72: #{tpu_custom_call.1} parent=1 // pred_region
      %1020 = vsyncadd [#allocation15], 0
      %s1021 = sshll.u32 [#allocation14], 4
      %s1022 = int_to_ptr.vmem [resolvable:$true] %s1021
      %s1023 = sshll.u32 %s11, 4
      %s1024 = int_to_ptr.hbm [resolvable:$true] %s1023
      %1029 = dma.vmem_to_hbm [thread:$0]  %s1022, 2048, %s1024, [#allocation15], 128, 128, 8
    $region73: #{tpu_custom_call.1} parent=1 // pred_fallthru
      _
    // Predicated region
    $region74: #{tpu_custom_call.1} parent=1 // pred_check
      _
    $region75: #{tpu_custom_call.1} parent=1 // pred_check_branch
      %1031 = sbr.rel (0) target = $region77
    $region76: #{tpu_custom_call.1} parent=1 // pred_region
      %1033 = dma.done [#allocation4], 2048
    $region77: #{tpu_custom_call.1} parent=1 // pred_fallthru
      _
    // Predicated region
    $region78: #{tpu_custom_call.1} parent=1 // pred_check
      _
    $region79: #{tpu_custom_call.1} parent=1 // pred_check_branch
      %1035 = sbr.rel (0) target = $region81
    $region80: #{tpu_custom_call.1} parent=1 // pred_region
      %1037 = dma.done [#allocation15], 2048
    $region81: #{tpu_custom_call.1} parent=1 // pred_fallthru
      _
    %1038 = vsyncpa [#allocation3], 1
    %1039 = vsyncpa [#allocation6], 1
    %1040 = vsyncpa [#allocation9], 1
    %1041 = vsyncpa [#allocation12], 1
    %1042 = vsyncpa [#allocation4], 1
    %1043 = vsyncpa [#allocation15], 1

</llo_original>
